<compile_context>
chip_gen: v5e
topology: v5e:2x2
jax: 0.10.0
libtpu: 0.0.40
codegen_flags: <defaults>
</compile_context>

<pallas_src>
import jax
import jax.numpy as jnp
from jax.experimental import pallas as pl
from jax.experimental.pallas import tpu as pltpu

_LANES = 128                      # vreg lane width (last-dim tile)
_SUBLANES = 8                     # sublane tile
_BLOCK_BYTES = 2 * 1024 * 1024    # ~2 MiB per input block; 2x(in)+2x(out) ~ 8 MiB VMEM
_SMALL_N_FASTPATH = 64 * 1024     # below this many elements, plain jnp wins
_MIN_GRID_STEPS = 8               # >= ~4 tiles per TensorCore on v7x (2 TCs)


def _scale_shift_kernel(w_ref, b_ref, x_ref, o_ref):
    # w/b are (1, 1) SMEM scalars (f32); read once per tile.
    w = w_ref[0, 0]
    b = b_ref[0, 0]
    x = x_ref[...].astype(jnp.float32)
    o_ref[...] = (x * w + b).astype(o_ref.dtype)


def _round_up(v: int, m: int) -> int:
    return -(-v // m) * m


def linear_regression_v2(
    x: jax.Array,
    weight: jax.Array,
    bias: jax.Array,
    *,
    min_kernel_elems: int = _SMALL_N_FASTPATH,
) -> jax.Array:
    """Pallas equivalent of nn.Linear(1, 1) applied to x of shape (N, 1).

    weight: (1, 1) (PyTorch convention: (out_features, in_features)), bias: (1,).
    `min_kernel_elems` controls the small-N jnp fast path (set 0 to force the kernel).
    """
    assert x.ndim == 2 and x.shape[1] == 1, "expected (N, 1) input"
    n = x.shape[0]
    out_dtype = x.dtype

    w = weight.reshape(()).astype(jnp.float32)
    b = bias.reshape(()).astype(jnp.float32)

    rows = n // _LANES
    # ---- small-N fast path: kernel launch / repack is pure overhead here ----
    if n < min_kernel_elems or rows == 0:
        return (x.astype(jnp.float32) * w + b).astype(out_dtype)

    # ---- lane-dense slab: bulk (rows*128 elements) goes through the kernel ----
    main = rows * _LANES
    flat = x.reshape(-1)                          # free reshape (contiguous)
    if main == n:
        slab = flat.reshape(rows, _LANES)         # zero-copy wrapper
    else:
        # Only the < 128-element tail is handled outside the kernel (below).
        slab = flat[:main].reshape(rows, _LANES)

    # ---- tile sizing: byte budget, then cap so the grid has >= ~8 steps ----
    itemsize = jnp.dtype(out_dtype).itemsize
    tm_budget = max(
        _SUBLANES,
        (_BLOCK_BYTES // (itemsize * _LANES)) // _SUBLANES * _SUBLANES,
    )
    tm_split = _round_up(pl.cdiv(rows, _MIN_GRID_STEPS), _SUBLANES)
    tm = max(_SUBLANES, min(tm_budget, tm_split))
    grid = (pl.cdiv(rows, tm),)                   # trailing partial block is masked

    w_smem = w.reshape(1, 1)
    b_smem = b.reshape(1, 1)

    out_slab = pl.pallas_call(
        _scale_shift_kernel,
        out_shape=jax.ShapeDtypeStruct((rows, _LANES), out_dtype),
        grid_spec=pl.GridSpec(
            grid=grid,
            in_specs=[
                pl.BlockSpec((1, 1), lambda i: (0, 0), memory_space=pltpu.SMEM),
                pl.BlockSpec((1, 1), lambda i: (0, 0), memory_space=pltpu.SMEM),
                pl.BlockSpec((tm, _LANES), lambda i: (i, 0)),
            ],
            out_specs=pl.BlockSpec((tm, _LANES), lambda i: (i, 0)),
        ),
        compiler_params=pltpu.CompilerParams(
            dimension_semantics=("parallel",),
            vmem_limit_bytes=32 * 1024 * 1024,
        ),
    )(w_smem, b_smem, slab)

    y_main = out_slab.reshape(main)
    if main == n:
        return y_main.reshape(n, 1)

    # Unaligned N: compute the (< 128 element) tail in plain jnp and append.
    tail = flat[main:]
    y_tail = (tail.astype(jnp.float32) * w + b).astype(out_dtype)
    return jnp.concatenate([y_main, y_tail]).reshape(n, 1)


if __name__ == "__main__":
    key = jax.random.PRNGKey(0)
    kx, kw, kb, kx2, kx3 = jax.random.split(key, 5)

    # Deterministic parameters, same shapes as nn.Linear(1, 1).
    weight = jax.random.uniform(kw, (1, 1), dtype=jnp.float32, minval=-1.0, maxval=1.0)
    bias = jax.random.uniform(kb, (1,), dtype=jnp.float32, minval=-1.0, maxval=1.0)

    # Case 1: tiny batch (N=8) -> small-N jnp fast path.
    x = jax.random.normal(kx, (8, 1), dtype=jnp.float32)
    y = jax.block_until_ready(linear_regression_v2(x, weight, bias))
    y_ref = x @ weight.T + bias
    assert y.shape == (8, 1)
    assert jnp.allclose(y, y_ref, atol=1e-6, rtol=1e-6)

    # Case 2: N=3000, kernel path forced -> unaligned N (partial trailing block
    # inside the kernel + <128-element jnp tail, multi-step grid).
    x2 = jax.random.normal(kx2, (3000, 1), dtype=jnp.float32)
    y2 = jax.block_until_ready(linear_regression_v2(x2, weight, bias, min_kernel_elems=0))
    y2_ref = x2 @ weight.T + bias
    assert y2.shape == (3000, 1)
    assert jnp.allclose(y2, y2_ref, atol=1e-6, rtol=1e-6)

    # Case 3: N=4096, kernel path forced -> 128-aligned, zero-copy wrapper.
    x3 = jax.random.normal(kx3, (4096, 1), dtype=jnp.float32)
    y3 = jax.block_until_ready(linear_regression_v2(x3, weight, bias, min_kernel_elems=0))
    y3_ref = x3 @ weight.T + bias
    assert y3.shape == (4096, 1)
    assert jnp.allclose(y3, y3_ref, atol=1e-6, rtol=1e-6)

    print("KERNEL_OK")
</pallas_src>

<mosaic_0001>
module attributes {stable_mosaic.version = 11 : i64} {
  func.func @_scale_shift_kernel(%arg0: i32, %arg1: memref<1x1xf32, #tpu.memory_space<smem>>, %arg2: memref<1x1xf32, #tpu.memory_space<smem>>, %arg3: memref<8x128xf32, #tpu.memory_space<vmem>>, %arg4: memref<8x128xf32, #tpu.memory_space<vmem>>) attributes {dimension_semantics = [#tpu.dimension_semantics<parallel>], iteration_bounds = array<i64: 3>, scalar_prefetch = 0 : i64, scratch_operands = 0 : i64, tpu.core_type = #tpu.core_type<tc>, window_params = [{transform_indices = @transform_0, window_bounds = array<i64: 1, 1>}, {transform_indices = @transform_1, window_bounds = array<i64: 1, 1>}, {transform_indices = @transform_2, window_bounds = array<i64: 8, 128>}, {transform_indices = @transform_3, window_bounds = array<i64: 8, 128>}]} {
    %c0 = arith.constant 0 : index
    %c0_0 = arith.constant 0 : index
    %0 = memref.load %arg1[%c0, %c0_0] : memref<1x1xf32, #tpu.memory_space<smem>>
    %c0_1 = arith.constant 0 : index
    %c0_2 = arith.constant 0 : index
    %1 = memref.load %arg2[%c0_1, %c0_2] : memref<1x1xf32, #tpu.memory_space<smem>>
    %c0_3 = arith.constant 0 : index
    %c0_4 = arith.constant 0 : index
    %2 = vector.load %arg3[%c0_3, %c0_4] : memref<8x128xf32, #tpu.memory_space<vmem>>, vector<8x128xf32>
    %3 = vector.broadcast %0 : f32 to vector<8x128xf32>
    %4 = arith.mulf %2, %3 : vector<8x128xf32>
    %5 = vector.broadcast %1 : f32 to vector<8x128xf32>
    %6 = arith.addf %4, %5 : vector<8x128xf32>
    %c0_5 = arith.constant 0 : index
    %c0_6 = arith.constant 0 : index
    %7 = vector.load %arg4[%c0_5, %c0_6] : memref<8x128xf32, #tpu.memory_space<vmem>>, vector<8x128xf32>
    tpu.vector_store %arg4[%c0_5, %c0_6], %6 {strides = array<i32>} : memref<8x128xf32, #tpu.memory_space<vmem>>, vector<8x128xf32>,
    return
  }
  func.func @transform_0(%arg0: i32) -> (i32, i32) {
    %c0_i32 = arith.constant 0 : i32
    %c0_i32_0 = arith.constant 0 : i32
    %c0_i32_1 = arith.constant 0 : i32
    return %c0_i32, %c0_i32_0 : i32, i32
  }
  func.func @transform_1(%arg0: i32) -> (i32, i32) {
    %c0_i32 = arith.constant 0 : i32
    %c0_i32_0 = arith.constant 0 : i32
    %c0_i32_1 = arith.constant 0 : i32
    return %c0_i32, %c0_i32_0 : i32, i32
  }
  func.func @transform_2(%arg0: i32) -> (i32, i32) {
    %c0_i32 = arith.constant 0 : i32
    %c0_i32_0 = arith.constant 0 : i32
    return %arg0, %c0_i32 : i32, i32
  }
  func.func @transform_3(%arg0: i32) -> (i32, i32) {
    %c0_i32 = arith.constant 0 : i32
    %c0_i32_0 = arith.constant 0 : i32
    return %arg0, %c0_i32 : i32, i32
  }
}

</mosaic_0001>

<llo_original>
// kernel: tpu_custom_call.1
$region0: #{tpu_custom_call.1}
  #allocation0 [shape = 'u32[]', space=smem, size = 0x4, offset = 0x4, fixed_abs, tag = 'smem constant byte address 0x4 - core index']
  #allocation1 [shape = 'u32[72,128]{1,0:T(1,128)}', space=vmem, size = 0x9000, scoped, tag = 'internal scratch']
  #allocation2 [shape = 'f32[1,1]{1,0:T(1,128)S(6)}', space=smem, size = 0x200, scoped, tag = 'scoped memory for tpu_custom_call.1']
  #allocation3 [shape = 'f32[1,1]{1,0:T(1,128)S(6)}', space=smem, size = 0x200, scoped, tag = 'scoped memory for tpu_custom_call.1']
  %s0 = inlined_call_operand.<no memory space> [shape: f32[1,1], index: 0, kind: input, shape index: {}]
  %s1 = inlined_call_operand.<no memory space> [shape: f32[1,1], index: 1, kind: input, shape index: {}]
  %s2 = inlined_call_operand.hbm [shape: f32[23,128], index: 2, kind: input, shape index: {}]
  %s3 = inlined_call_operand.hbm [shape: f32[23,128], index: 3, kind: output, shape index: {}]
  %s4 = sld [smem:[#allocation0]]
  $region49: #{tpu_custom_call.1} parent=0
    _
  %s6 = ssub.s32 1, %s4
  %s7 = scalar_select 0, %s6, %s4
  %8 = sst [smem:[#allocation2]] %s0
  %9 = sst [smem:[#allocation3]] %s1
  $region1: #{tpu_custom_call.1} parent=0
    #allocation4 [shape = 'u8[8192]{0}', space=vmem, size = 0x2000, scoped, tag = 'input window, operand 2']
    #allocation5 [shape = 's32[2]{0}', space=sflag, size = 0x8, scoped, tag = 'scoped memory for tpu_custom_call.1']
    #allocation6 [shape = 's32[2]{0}', space=sflag, size = 0x8, scoped, tag = 'scoped memory for tpu_custom_call.1']
    #allocation7 [shape = 'u8[8192]{0}', space=vmem, size = 0x2000, scoped, tag = 'output window, operand 0']
    %10 = vsyncpa [#allocation5], 0
    %s11 = scalar_lea.sflag [#allocation5], 1
    %12 = vsyncpa %s11, 0
    %13 = vsyncpa [#allocation6], 0
    %s14 = scalar_lea.sflag [#allocation6], 1
    %15 = vsyncpa %s14, 0
    loop: start=0, step=1, limit=5
    $region2: #{tpu_custom_call.1} parent=1 // loop_pre_header
      _
    $region3: #{tpu_custom_call.1} parent=1 // loop_header
      %s17 = sphi 0, %s21
      %p18 = scmp.ge.s32.totalorder %s17, 5
      %s25 = sphi 0, %s25
      %s27 = sphi 0, %s25
      %s28 = sphi 0, %s27
      %s42 = sphi 0, %s28
      %s46 = sphi 0, %s46
      %s48 = sphi 0, %s46
      %s49 = sphi 0, %s48
      %s63 = sphi 0, %s49
      %s69 = sphi 0, %s71
      %s72 = sphi 0, %s69
      %s73 = sphi 0, %s72
      %s89 = sphi 0, %s73
      %s95 = sphi 0, %s97
      %s98 = sphi 0, %s95
      %s99 = sphi 0, %s98
      %s115 = sphi 0, %s99
    $region4: #{tpu_custom_call.1} parent=1 // loop_header_branch
      %20 = sbr.rel (%p18) target = $region8
    $region5: #{tpu_custom_call.1} parent=1 // loop_body
      %s22 = ssub.s32 %s17, 1
      %s23 = ssub.s32 %s17, 2
      %s24 = sadd.s32 %s17, 1
      %s26 = sadd.s32 %s25, 1
      %p29 = scmp.eq.s32.totalorder %s17, 2
      %p30 = scmp.ne.s32.totalorder %s25, %s27
      %p31 = scmp.eq.s32.totalorder %s17, 0
      %p32 = por %p30, %p31
      %p33 = scmp.ne.s32.totalorder %s25, %s27
      %p34 = scmp.eq.s32.totalorder %s22, 2
      %p35 = por %p33, %p34
      %p36 = scmp.ne.s32.totalorder %s27, %s28
      %p37 = scmp.eq.s32.totalorder %s22, 0
      %p38 = por %p36, %p37
      %p39 = scmp.ne.s32.totalorder %s27, %s28
      %p40 = scmp.eq.s32.totalorder %s23, 2
      %p41 = por %p39, %p40
      %p43 = scmp.ne.s32.totalorder %s28, %s42
      %p44 = scmp.eq.s32.totalorder %s23, 0
      %p45 = por %p43, %p44
      %s47 = sadd.s32 %s46, 1
      %p50 = scmp.eq.s32.totalorder %s17, 2
      %p51 = scmp.ne.s32.totalorder %s46, %s48
      %p52 = scmp.eq.s32.totalorder %s17, 0
      %p53 = por %p51, %p52
      %p54 = scmp.ne.s32.totalorder %s46, %s48
      %p55 = scmp.eq.s32.totalorder %s22, 2
      %p56 = por %p54, %p55
      %p57 = scmp.ne.s32.totalorder %s48, %s49
      %p58 = scmp.eq.s32.totalorder %s22, 0
      %p59 = por %p57, %p58
      %p60 = scmp.ne.s32.totalorder %s48, %s49
      %p61 = scmp.eq.s32.totalorder %s23, 2
      %p62 = por %p60, %p61
      %p64 = scmp.ne.s32.totalorder %s49, %s63
      %p65 = scmp.eq.s32.totalorder %s23, 0
      %p66 = por %p64, %p65
      %s67 = ssub.s32 %s17, %s24
      %p68 = scmp.eq.s32.totalorder %s67, 0
      %s70 = sadd.s32 %s69, 1
      %s71 = scalar_select %p68, %s69, %s70
      %p74 = pneg %p68
      %p75 = scmp.eq.s32.totalorder %s17, 2
      %p76 = por %p74, %p75
      %p77 = scmp.ne.s32.totalorder %s69, %s72
      %p78 = scmp.eq.s32.totalorder %s17, 0
      %p79 = por %p77, %p78
      %p80 = scmp.ne.s32.totalorder %s69, %s72
      %p81 = scmp.eq.s32.totalorder %s22, 2
      %p82 = por %p80, %p81
      %p83 = scmp.ne.s32.totalorder %s72, %s73
      %p84 = scmp.eq.s32.totalorder %s22, 0
      %p85 = por %p83, %p84
      %p86 = scmp.ne.s32.totalorder %s72, %s73
      %p87 = scmp.eq.s32.totalorder %s23, 2
      %p88 = por %p86, %p87
      %p90 = scmp.ne.s32.totalorder %s73, %s89
      %p91 = scmp.eq.s32.totalorder %s23, 0
      %p92 = por %p90, %p91
      %s93 = ssub.s32 %s17, %s24
      %p94 = scmp.eq.s32.totalorder %s93, 0
      %s96 = sadd.s32 %s95, 1
      %s97 = scalar_select %p94, %s95, %s96
      %p100 = pneg %p94
      %p101 = scmp.eq.s32.totalorder %s17, 2
      %p102 = por %p100, %p101
      %p103 = scmp.ne.s32.totalorder %s95, %s98
      %p104 = scmp.eq.s32.totalorder %s17, 0
      %p105 = por %p103, %p104
      %p106 = scmp.ne.s32.totalorder %s95, %s98
      %p107 = scmp.eq.s32.totalorder %s22, 2
      %p108 = por %p106, %p107
      %p109 = scmp.ne.s32.totalorder %s98, %s99
      %p110 = scmp.eq.s32.totalorder %s22, 0
      %p111 = por %p109, %p110
      %p112 = scmp.ne.s32.totalorder %s98, %s99
      %p113 = scmp.eq.s32.totalorder %s23, 2
      %p114 = por %p112, %p113
      %p116 = scmp.ne.s32.totalorder %s99, %s115
      %p117 = scmp.eq.s32.totalorder %s23, 0
      %p118 = por %p116, %p117
      %p119 = scmp.le.s32.totalorder 1, %s17
      %p120 = scmp.lt.s32.totalorder %s17, 4
      %p121 = pnand %p119, %p120
      %p122 = pneg %p121
      // Predicated region
      $region9: #{tpu_custom_call.1} parent=5 // pred_check
        _
      $region10: #{tpu_custom_call.1} parent=5 // pred_check_branch
        %124 = sbr.rel (%p121) target = $region12
      $region11: #{tpu_custom_call.1} parent=5 // pred_region
        %s125 = ssub.s32 %s17, 1
        // Predicated region
        $region13: #{tpu_custom_call.1} parent=11 // pred_check
          %p126 = pneg %p38
        $region14: #{tpu_custom_call.1} parent=11 // pred_check_branch
          %128 = sbr.rel (%p126) target = $region16
        $region15: #{tpu_custom_call.1} parent=11 // pred_region
          _
        $region16: #{tpu_custom_call.1} parent=11 // pred_fallthru
          _
        // Predicated region
        $region17: #{tpu_custom_call.1} parent=11 // pred_check
          %p129 = pneg %p59
        $region18: #{tpu_custom_call.1} parent=11 // pred_check_branch
          %131 = sbr.rel (%p129) target = $region20
        $region19: #{tpu_custom_call.1} parent=11 // pred_region
          _
        $region20: #{tpu_custom_call.1} parent=11 // pred_fallthru
          _
      $region12: #{tpu_custom_call.1} parent=5 // pred_fallthru
        _
      %p132 = scmp.lt.s32.totalorder %s17, 3
      // Predicated region
      $region21: #{tpu_custom_call.1} parent=5 // pred_check
        %p133 = pneg %p132
      $region22: #{tpu_custom_call.1} parent=5 // pred_check_branch
        %135 = sbr.rel (%p133) target = $region24
      $region23: #{tpu_custom_call.1} parent=5 // pred_region
        // Predicated region
        $region25: #{tpu_custom_call.1} parent=23 // pred_check
          %p136 = pneg %p79
        $region26: #{tpu_custom_call.1} parent=23 // pred_check_branch
          %138 = sbr.rel (%p136) target = $region28
        $region27: #{tpu_custom_call.1} parent=23 // pred_region
          %s139 = sand.u32 %s69, 1
          %s140 = scalar_lea.sflag [#allocation5], %s139
          %s141 = sand.u32 %s69, 1
          %s142 = smul.addr %s141, 8
          %s143 = scalar_lea.vmem [#allocation4], %s142
          %145 = vsyncadd %s140, 0
          %s146 = smul.addr %s17, 8
          %s147 = scalar_lea.hbm %s2, %s146
          %s149 = sshll.u32 %s147, 4
          %s150 = int_to_ptr.hbm [resolvable:$true] %s149
          %s151 = sshll.u32 %s143, 4
          %s152 = int_to_ptr.vmem [resolvable:$true] %s151
          %154 = dma.hbm_to_vmem [thread:$0]  %s150, 128, %s152, %s140
        $region28: #{tpu_custom_call.1} parent=23 // pred_fallthru
          _
      $region24: #{tpu_custom_call.1} parent=5 // pred_fallthru
        _
      %p155 = scmp.le.s32.totalorder 1, %s17
      %p156 = scmp.lt.s32.totalorder %s17, 4
      %p157 = pnand %p155, %p156
      %p158 = pneg %p157
      // Predicated region
      $region29: #{tpu_custom_call.1} parent=5 // pred_check
        _
      $region30: #{tpu_custom_call.1} parent=5 // pred_check_branch
        %160 = sbr.rel (%p157) target = $region32
      $region31: #{tpu_custom_call.1} parent=5 // pred_region
        %s161 = ssub.s32 %s17, 1
        %s162 = sand.u32 %s72, 1
        %s163 = scalar_lea.sflag [#allocation5], %s162
        %s164 = sand.u32 %s72, 1
        %s165 = smul.addr %s164, 8
        %s166 = scalar_lea.vmem [#allocation4], %s165
        // Predicated region
        $region33: #{tpu_custom_call.1} parent=31 // pred_check
          %p167 = pneg %p85
        $region34: #{tpu_custom_call.1} parent=31 // pred_check_branch
          %169 = sbr.rel (%p167) target = $region36
        $region35: #{tpu_custom_call.1} parent=31 // pred_region
          %171 = dma.done %s163, 128
        $region36: #{tpu_custom_call.1} parent=31 // pred_fallthru
          _
        %p172 = pneg %p38
        %p173 = pneg %p35
        %p174 = pneg %p59
        %p175 = pneg %p56
        %s176 = sand.u32 %s72, 1
        %s177 = scalar_lea.sflag [#allocation5], %s176
        %s178 = sand.u32 %s72, 1
        %s179 = smul.addr %s178, 8
        %s180 = scalar_lea.vmem [#allocation4], %s179
        %p181 = pneg %p85
        %p182 = pneg %p82
        %p183 = pneg %p111
        %p184 = pneg %p108
        %s185 = sand.u32 %s98, 1
        %s186 = scalar_lea.sflag [#allocation6], %s185
        %s187 = sand.u32 %s98, 1
        %s188 = smul.addr %s187, 8
        %s189 = scalar_lea.vmem [#allocation7], %s188
        %s190 = sld [smem:[#allocation2]]
        %s191 = sld [smem:[#allocation3]]
        %v192 = vld [vmem:[%s166] sm:$0xff]
        %v193 = vstv %s190
        %v194 = vmul.f32 %v192, %v193
        %v195 = vstv %s191
        %v196 = vadd.f32 %v194, %v195
        %197 = vst [vmem:[%s189] sm:$0xff] %v196
        %s198 = sand.u32 %s98, 1
        %s199 = scalar_lea.sflag [#allocation6], %s198
        %s200 = sand.u32 %s98, 1
        %s201 = smul.addr %s200, 8
        %s202 = scalar_lea.vmem [#allocation7], %s201
        // Predicated region
        $region37: #{tpu_custom_call.1} parent=31 // pred_check
          %p203 = pneg %p108
        $region38: #{tpu_custom_call.1} parent=31 // pred_check_branch
          %205 = sbr.rel (%p203) target = $region40
        $region39: #{tpu_custom_call.1} parent=31 // pred_region
          %207 = vsyncadd %s199, 0
          %s208 = smul.addr %s22, 8
          %s209 = scalar_lea.hbm %s3, %s208
          %s211 = sshll.u32 %s202, 4
          %s212 = int_to_ptr.vmem [resolvable:$true] %s211
          %s213 = sshll.u32 %s209, 4
          %s214 = int_to_ptr.hbm [resolvable:$true] %s213
          %216 = dma.vmem_to_hbm [thread:$0]  %s212, 128, %s214, %s199
        $region40: #{tpu_custom_call.1} parent=31 // pred_fallthru
          _
      $region32: #{tpu_custom_call.1} parent=5 // pred_fallthru
        _
      %p217 = scmp.le.s32.totalorder 2, %s17
      // Predicated region
      $region41: #{tpu_custom_call.1} parent=5 // pred_check
        %p218 = pneg %p217
      $region42: #{tpu_custom_call.1} parent=5 // pred_check_branch
        %220 = sbr.rel (%p218) target = $region44
      $region43: #{tpu_custom_call.1} parent=5 // pred_region
        %s221 = ssub.s32 %s17, 2
        // Predicated region
        $region45: #{tpu_custom_call.1} parent=43 // pred_check
          %p222 = pneg %p114
        $region46: #{tpu_custom_call.1} parent=43 // pred_check_branch
          %224 = sbr.rel (%p222) target = $region48
        $region47: #{tpu_custom_call.1} parent=43 // pred_region
          %s225 = sand.u32 %s99, 1
          %s226 = scalar_lea.sflag [#allocation6], %s225
          %s227 = sand.u32 %s99, 1
          %s228 = smul.addr %s227, 8
          %s229 = scalar_lea.vmem [#allocation7], %s228
          %231 = dma.done %s226, 128
        $region48: #{tpu_custom_call.1} parent=43 // pred_fallthru
          _
      $region44: #{tpu_custom_call.1} parent=5 // pred_fallthru
        _
    $region6: #{tpu_custom_call.1} parent=1 // loop_footer
      %s21 = sadd.s32 1, %s17
    $region7: #{tpu_custom_call.1} parent=1 // loop_footer_branch
      %16 = sbr.rel target = $region3
    $region8: #{tpu_custom_call.1} parent=1 // loop_exit
      _
    %232 = vsyncpa [#allocation5], 1
    %s233 = scalar_lea.sflag [#allocation5], 1
    %234 = vsyncpa %s233, 1
    %235 = vsyncpa [#allocation6], 1
    %s236 = scalar_lea.sflag [#allocation6], 1
    %237 = vsyncpa %s236, 1

</llo_original>
